<compile_context>
chip_gen: v7x
topology: tpu7x:2x2x1
jax: 0.10.0
libtpu: 0.0.40
codegen_flags: <defaults>
</compile_context>

<pallas_src>
import jax
import jax.numpy as jnp
from jax import lax
from jax.experimental import pallas as pl
from jax.experimental.pallas import tpu as pltpu

# ---- small synthetic config (mirrors TextCNNConfig structure, scaled down) ----
BATCH = 2
SEQ_LEN = 16
VOCAB = 50
EMB = 32             # embedding_size
FNUM = 16            # filter_num
FILTER_SIZES = (2, 3, 4)
NCLASS = 4           # class_number

TOT_COLS = sum(FILTER_SIZES) * FNUM   # 144 = width of the fused conv weight
OUT_PAD = 128                         # lane-dense padded logits width


def textcnn_kernel(tok_ref, table_ref, wcat_ref, bcat_ref, fcw_ref, fcb_ref,
                   out_ref):
    b_tile, L = tok_ref.shape

    # ---- embedding lookup inside the kernel: one-hot @ table on the MXU ----
    ids = tok_ref[...]                                              # (B, L) int32
    vocab_iota = lax.broadcasted_iota(jnp.int32, (b_tile, L, VOCAB), 2)
    onehot = (vocab_iota == ids[:, :, None]).astype(jnp.bfloat16)
    onehot = onehot.reshape(b_tile * L, VOCAB)                      # (B*L, V)
    emb = jnp.dot(onehot, table_ref[...],
                  preferred_element_type=jnp.float32)               # (B*L, E) f32

    # ---- single fused conv matmul for all filter sizes / shifts ----
    y = jnp.dot(emb.astype(jnp.bfloat16), wcat_ref[...],
                preferred_element_type=jnp.float32)                 # (B*L, 144)
    y = y.reshape(b_tile, L, TOT_COLS)                              # (B, L, 144)

    # ---- shifted adds + bias + ReLU + max-pool over time (VPU, f32) ----
    pooled = []
    col = 0
    for i, k in enumerate(FILTER_SIZES):
        T = L - k + 1
        acc = jnp.zeros((b_tile, T, FNUM), jnp.float32)
        for j in range(k):                     # static unroll over kernel height
            acc = acc + y[:, j:j + T, col:col + FNUM]
            col += FNUM
        bias_i = bcat_ref[i, :].reshape(1, 1, FNUM)
        acc = jnp.maximum(acc + bias_i, 0.0)   # bias + ReLU
        pooled.append(jnp.max(acc, axis=1))    # max over time -> (B, F)

    feat = jnp.concatenate(pooled, axis=-1)    # (B, 3F)

    # TODO(synk): Dropout(0.5) is identity in eval mode; training-mode masking not implemented.
    # fc weight is zero-padded from NCLASS to 128 lanes -> lane-dense store.
    logits = jnp.dot(feat.astype(jnp.bfloat16), fcw_ref[...],
                     preferred_element_type=jnp.float32) + fcb_ref[...]
    out_ref[...] = logits.astype(out_ref.dtype)


def textcnn_forward(token_ids, params):
    B, L = token_ids.shape
    n_feat = len(FILTER_SIZES) * FNUM

    # bf16 MXU operands (accumulation stays f32 inside the kernel).
    table = params["embedding"].astype(jnp.bfloat16)                # (V, E)
    # Fused conv weight: columns ordered filter-major, shift-minor (matches kernel).
    wcat = jnp.concatenate(
        [params["conv_w"][i][j]
         for i, k in enumerate(FILTER_SIZES) for j in range(k)],
        axis=1).astype(jnp.bfloat16)                                # (E, 144)
    bcat = jnp.concatenate(params["conv_b"], axis=0)                # (3, F) f32

    # Lane-dense (128-wide) fc weight / bias, zero-padded past NCLASS.
    fcw_pad = jnp.zeros((n_feat, OUT_PAD), jnp.bfloat16)
    fcw_pad = fcw_pad.at[:, :NCLASS].set(params["fc_w"].astype(jnp.bfloat16))
    fcb_pad = jnp.zeros((1, OUT_PAD), jnp.float32)
    fcb_pad = fcb_pad.at[:, :NCLASS].set(params["fc_b"])

    # Batch grid (one step at this toy size; shards across cores when B grows).
    b_tile = B
    grid = (pl.cdiv(B, b_tile),)

    def full_spec(shape):
        return pl.BlockSpec(shape, lambda i, _s=shape: (0,) * len(_s))

    out = pl.pallas_call(
        textcnn_kernel,
        out_shape=jax.ShapeDtypeStruct((B, OUT_PAD), jnp.float32),
        grid_spec=pltpu.PrefetchScalarGridSpec(
            num_scalar_prefetch=0,
            grid=grid,
            in_specs=[
                pl.BlockSpec((b_tile, L), lambda i: (i, 0)),   # token ids
                full_spec(table.shape),                        # embedding table
                full_spec(wcat.shape),                         # fused conv weight
                full_spec(bcat.shape),                         # conv biases
                full_spec(fcw_pad.shape),                      # fc weight (padded)
                full_spec(fcb_pad.shape),                      # fc bias (padded)
            ],
            out_specs=pl.BlockSpec((b_tile, OUT_PAD), lambda i: (i, 0)),
        ),
        compiler_params=pltpu.CompilerParams(
            dimension_semantics=("parallel",)),
    )(token_ids, table, wcat, bcat, fcw_pad, fcb_pad)

    return out[:, :NCLASS]


def textcnn_reference(token_ids, params):
    # Pure-JAX f32 reference of the PyTorch forward pass.
    emb = jnp.take(params["embedding"], token_ids, axis=0)
    pooled = []
    for i, k in enumerate(FILTER_SIZES):
        w = params["conv_w"][i]              # (k, E, F)
        b = params["conv_b"][i]              # (1, F)
        T = SEQ_LEN - k + 1
        acc = jnp.zeros((token_ids.shape[0], T, FNUM), jnp.float32)
        for j in range(k):
            acc = acc + jnp.einsum("ble,ef->blf", emb[:, j:j + T, :], w[j])
        acc = jnp.maximum(acc + b[None], 0.0)
        pooled.append(jnp.max(acc, axis=1))
    feat = jnp.concatenate(pooled, axis=1)
    return feat @ params["fc_w"] + params["fc_b"]


def init_params(key):
    ks = jax.random.split(key, 3 + 2 * len(FILTER_SIZES))
    params = {
        "embedding": jax.random.normal(ks[0], (VOCAB, EMB), jnp.float32) * 0.1,
        "fc_w": jax.random.normal(ks[1], (len(FILTER_SIZES) * FNUM, NCLASS),
                                  jnp.float32) * 0.1,
        "fc_b": jax.random.normal(ks[2], (1, NCLASS), jnp.float32) * 0.1,
        "conv_w": [],
        "conv_b": [],
    }
    for i, k in enumerate(FILTER_SIZES):
        params["conv_w"].append(
            jax.random.normal(ks[3 + 2 * i], (k, EMB, FNUM), jnp.float32) * 0.1)
        params["conv_b"].append(
            jax.random.normal(ks[4 + 2 * i], (1, FNUM), jnp.float32) * 0.1)
    return params


if __name__ == "__main__":
    key = jax.random.PRNGKey(0)
    pkey, xkey = jax.random.split(key)
    params = init_params(pkey)
    x = jax.random.randint(xkey, (BATCH, SEQ_LEN), 0, VOCAB, dtype=jnp.int32)

    out = textcnn_forward(x, params)
    out = jax.block_until_ready(out)

    ref = textcnn_reference(x, params)
    assert out.shape == (BATCH, NCLASS)
    # bf16 MXU inputs with f32 accumulation -> slightly looser tolerance vs f32 ref.
    assert jnp.allclose(out, ref, atol=3e-2, rtol=3e-2)
    print("KERNEL_OK")
</pallas_src>

<mosaic_0001>
module attributes {stable_mosaic.version = 11 : i64} {
  func.func @textcnn_kernel(%arg0: i32, %arg1: memref<2x16xi32, #tpu.memory_space<vmem>>, %arg2: memref<50x32xbf16, #tpu.memory_space<vmem>>, %arg3: memref<32x144xbf16, #tpu.memory_space<vmem>>, %arg4: memref<3x16xf32, #tpu.memory_space<vmem>>, %arg5: memref<48x128xbf16, #tpu.memory_space<vmem>>, %arg6: memref<1x128xf32, #tpu.memory_space<vmem>>, %arg7: memref<2x128xf32, #tpu.memory_space<vmem>>) attributes {dimension_semantics = [#tpu.dimension_semantics<parallel>], iteration_bounds = array<i64: 1>, scalar_prefetch = 0 : i64, scratch_operands = 0 : i64, tpu.core_type = #tpu.core_type<tc>, window_params = [{transform_indices = @transform_0, window_bounds = array<i64: 2, 16>}, {pipeline_mode = #tpu.pipeline_mode<synchronous>, transform_indices = @transform_1, window_bounds = array<i64: 50, 32>}, {pipeline_mode = #tpu.pipeline_mode<synchronous>, transform_indices = @transform_2, window_bounds = array<i64: 32, 144>}, {pipeline_mode = #tpu.pipeline_mode<synchronous>, transform_indices = @transform_3, window_bounds = array<i64: 3, 16>}, {pipeline_mode = #tpu.pipeline_mode<synchronous>, transform_indices = @transform_4, window_bounds = array<i64: 48, 128>}, {pipeline_mode = #tpu.pipeline_mode<synchronous>, transform_indices = @transform_5, window_bounds = array<i64: 1, 128>}, {transform_indices = @transform_6, window_bounds = array<i64: 2, 128>}]} {
    %c0 = arith.constant 0 : index
    %c0_0 = arith.constant 0 : index
    %0 = vector.load %arg1[%c0, %c0_0] : memref<2x16xi32, #tpu.memory_space<vmem>>, vector<2x16xi32>
    %1 = tpu.iota {dimensions = array<i32: 2>} : vector<2x16x50xi32>
    %2 = vector.shape_cast %0 : vector<2x16xi32> to vector<2x16x1xi32>
    %3 = vector.broadcast %2 : vector<2x16x1xi32> to vector<2x16x50xi32>
    %4 = arith.cmpi eq, %1, %3 : vector<2x16x50xi32>
    %5 = arith.extui %4 : vector<2x16x50xi1> to vector<2x16x50xi32>
    %6 = arith.sitofp %5 : vector<2x16x50xi32> to vector<2x16x50xf32>
    %7 = arith.truncf %6 : vector<2x16x50xf32> to vector<2x16x50xbf16>
    %8 = vector.shape_cast %7 : vector<2x16x50xbf16> to vector<32x50xbf16>
    %c0_1 = arith.constant 0 : index
    %c0_2 = arith.constant 0 : index
    %9 = vector.load %arg2[%c0_1, %c0_2] : memref<50x32xbf16, #tpu.memory_space<vmem>>, vector<50x32xbf16>
    %cst = arith.constant dense<0.000000e+00> : vector<32x32xf32>
    %10 = tpu.matmul %8, %9, %cst {dimension_numbers = #tpu.dot_dimension_numbers<[1], [0], [0], [1], [0, 0, 1, 1], [], []>} : vector<32x50xbf16>, vector<50x32xbf16>, vector<32x32xf32> -> vector<32x32xf32>
    %11 = arith.truncf %10 : vector<32x32xf32> to vector<32x32xbf16>
    %c0_3 = arith.constant 0 : index
    %c0_4 = arith.constant 0 : index
    %12 = vector.load %arg3[%c0_3, %c0_4] : memref<32x144xbf16, #tpu.memory_space<vmem>>, vector<32x144xbf16>
    %cst_5 = arith.constant dense<0.000000e+00> : vector<32x144xf32>
    %13 = tpu.matmul %11, %12, %cst_5 {dimension_numbers = #tpu.dot_dimension_numbers<[1], [0], [0], [1], [0, 0, 1, 1], [], []>} : vector<32x32xbf16>, vector<32x144xbf16>, vector<32x144xf32> -> vector<32x144xf32>
    %14 = vector.shape_cast %13 : vector<32x144xf32> to vector<2x16x144xf32>
    %cst_6 = arith.constant 0.000000e+00 : f32
    %15 = vector.broadcast %cst_6 : f32 to vector<2x15x16xf32>
    %16 = vector.extract_strided_slice %14 {offsets = [0, 0, 0], sizes = [2, 15, 16], strides = [1, 1, 1]} : vector<2x16x144xf32> to vector<2x15x16xf32>
    %17 = arith.addf %15, %16 : vector<2x15x16xf32>
    %18 = vector.extract_strided_slice %14 {offsets = [0, 1, 16], sizes = [2, 15, 16], strides = [1, 1, 1]} : vector<2x16x144xf32> to vector<2x15x16xf32>
    %19 = arith.addf %17, %18 : vector<2x15x16xf32>
    %c0_7 = arith.constant 0 : index
    %c0_8 = arith.constant 0 : index
    %20 = vector.load %arg4[%c0_7, %c0_8] : memref<3x16xf32, #tpu.memory_space<vmem>>, vector<1x16xf32>
    %21 = vector.shape_cast %20 : vector<1x16xf32> to vector<16xf32>
    %22 = vector.shape_cast %21 : vector<16xf32> to vector<1x1x16xf32>
    %23 = vector.broadcast %22 : vector<1x1x16xf32> to vector<2x15x16xf32>
    %24 = arith.addf %19, %23 : vector<2x15x16xf32>
    %cst_9 = arith.constant 0.000000e+00 : f32
    %25 = vector.broadcast %cst_9 : f32 to vector<2x15x16xf32>
    %26 = arith.maximumf %24, %25 : vector<2x15x16xf32>
    %cst_10 = arith.constant dense<0xFF800000> : vector<2x16xf32>
    %27 = vector.multi_reduction <maximumf>, %26, %cst_10 [1] : vector<2x15x16xf32> to vector<2x16xf32>
    %cst_11 = arith.constant 0.000000e+00 : f32
    %28 = vector.broadcast %cst_11 : f32 to vector<2x14x16xf32>
    %29 = vector.extract_strided_slice %14 {offsets = [0, 0, 32], sizes = [2, 14, 16], strides = [1, 1, 1]} : vector<2x16x144xf32> to vector<2x14x16xf32>
    %30 = arith.addf %28, %29 : vector<2x14x16xf32>
    %31 = vector.extract_strided_slice %14 {offsets = [0, 1, 48], sizes = [2, 14, 16], strides = [1, 1, 1]} : vector<2x16x144xf32> to vector<2x14x16xf32>
    %32 = arith.addf %30, %31 : vector<2x14x16xf32>
    %33 = vector.extract_strided_slice %14 {offsets = [0, 2, 64], sizes = [2, 14, 16], strides = [1, 1, 1]} : vector<2x16x144xf32> to vector<2x14x16xf32>
    %34 = arith.addf %32, %33 : vector<2x14x16xf32>
    %c1 = arith.constant 1 : index
    %c0_12 = arith.constant 0 : index
    %35 = vector.load %arg4[%c1, %c0_12] : memref<3x16xf32, #tpu.memory_space<vmem>>, vector<1x16xf32>
    %36 = vector.shape_cast %35 : vector<1x16xf32> to vector<16xf32>
    %37 = vector.shape_cast %36 : vector<16xf32> to vector<1x1x16xf32>
    %38 = vector.broadcast %37 : vector<1x1x16xf32> to vector<2x14x16xf32>
    %39 = arith.addf %34, %38 : vector<2x14x16xf32>
    %cst_13 = arith.constant 0.000000e+00 : f32
    %40 = vector.broadcast %cst_13 : f32 to vector<2x14x16xf32>
    %41 = arith.maximumf %39, %40 : vector<2x14x16xf32>
    %cst_14 = arith.constant dense<0xFF800000> : vector<2x16xf32>
    %42 = vector.multi_reduction <maximumf>, %41, %cst_14 [1] : vector<2x14x16xf32> to vector<2x16xf32>
    %cst_15 = arith.constant 0.000000e+00 : f32
    %43 = vector.broadcast %cst_15 : f32 to vector<2x13x16xf32>
    %44 = vector.extract_strided_slice %14 {offsets = [0, 0, 80], sizes = [2, 13, 16], strides = [1, 1, 1]} : vector<2x16x144xf32> to vector<2x13x16xf32>
    %45 = arith.addf %43, %44 : vector<2x13x16xf32>
    %46 = vector.extract_strided_slice %14 {offsets = [0, 1, 96], sizes = [2, 13, 16], strides = [1, 1, 1]} : vector<2x16x144xf32> to vector<2x13x16xf32>
    %47 = arith.addf %45, %46 : vector<2x13x16xf32>
    %48 = vector.extract_strided_slice %14 {offsets = [0, 2, 112], sizes = [2, 13, 16], strides = [1, 1, 1]} : vector<2x16x144xf32> to vector<2x13x16xf32>
    %49 = arith.addf %47, %48 : vector<2x13x16xf32>
    %50 = vector.extract_strided_slice %14 {offsets = [0, 3, 128], sizes = [2, 13, 16], strides = [1, 1, 1]} : vector<2x16x144xf32> to vector<2x13x16xf32>
    %51 = arith.addf %49, %50 : vector<2x13x16xf32>
    %c2 = arith.constant 2 : index
    %c0_16 = arith.constant 0 : index
    %52 = vector.load %arg4[%c2, %c0_16] : memref<3x16xf32, #tpu.memory_space<vmem>>, vector<1x16xf32>
    %53 = vector.shape_cast %52 : vector<1x16xf32> to vector<16xf32>
    %54 = vector.shape_cast %53 : vector<16xf32> to vector<1x1x16xf32>
    %55 = vector.broadcast %54 : vector<1x1x16xf32> to vector<2x13x16xf32>
    %56 = arith.addf %51, %55 : vector<2x13x16xf32>
    %cst_17 = arith.constant 0.000000e+00 : f32
    %57 = vector.broadcast %cst_17 : f32 to vector<2x13x16xf32>
    %58 = arith.maximumf %56, %57 : vector<2x13x16xf32>
    %cst_18 = arith.constant dense<0xFF800000> : vector<2x16xf32>
    %59 = vector.multi_reduction <maximumf>, %58, %cst_18 [1] : vector<2x13x16xf32> to vector<2x16xf32>
    %60 = tpu.concatenate %27, %42, %59 in 1 : vector<2x16xf32>, vector<2x16xf32>, vector<2x16xf32> -> vector<2x48xf32>
    %61 = arith.truncf %60 : vector<2x48xf32> to vector<2x48xbf16>
    %c0_19 = arith.constant 0 : index
    %c0_20 = arith.constant 0 : index
    %62 = vector.load %arg5[%c0_19, %c0_20] : memref<48x128xbf16, #tpu.memory_space<vmem>>, vector<48x128xbf16>
    %cst_21 = arith.constant dense<0.000000e+00> : vector<2x128xf32>
    %63 = tpu.matmul %61, %62, %cst_21 {dimension_numbers = #tpu.dot_dimension_numbers<[1], [0], [0], [1], [0, 0, 1, 1], [], []>} : vector<2x48xbf16>, vector<48x128xbf16>, vector<2x128xf32> -> vector<2x128xf32>
    %c0_22 = arith.constant 0 : index
    %c0_23 = arith.constant 0 : index
    %64 = vector.load %arg6[%c0_22, %c0_23] : memref<1x128xf32, #tpu.memory_space<vmem>>, vector<1x128xf32>
    %65 = vector.broadcast %64 : vector<1x128xf32> to vector<2x128xf32>
    %66 = arith.addf %63, %65 : vector<2x128xf32>
    %c0_24 = arith.constant 0 : index
    %c0_25 = arith.constant 0 : index
    %67 = vector.load %arg7[%c0_24, %c0_25] : memref<2x128xf32, #tpu.memory_space<vmem>>, vector<2x128xf32>
    tpu.vector_store %arg7[%c0_24, %c0_25], %66 {strides = array<i32>} : memref<2x128xf32, #tpu.memory_space<vmem>>, vector<2x128xf32>,
    return
  }
  func.func @transform_0(%arg0: i32) -> (i32, i32) {
    %c0_i32 = arith.constant 0 : i32
    %c0_i32_0 = arith.constant 0 : i32
    return %arg0, %c0_i32 : i32, i32
  }
  func.func @transform_1(%arg0: i32) -> (i32, i32) {
    %c0_i32 = arith.constant 0 : i32
    %c0_i32_0 = arith.constant 0 : i32
    %c0_i32_1 = arith.constant 0 : i32
    return %c0_i32, %c0_i32_0 : i32, i32
  }
  func.func @transform_2(%arg0: i32) -> (i32, i32) {
    %c0_i32 = arith.constant 0 : i32
    %c0_i32_0 = arith.constant 0 : i32
    %c0_i32_1 = arith.constant 0 : i32
    return %c0_i32, %c0_i32_0 : i32, i32
  }
  func.func @transform_3(%arg0: i32) -> (i32, i32) {
    %c0_i32 = arith.constant 0 : i32
    %c0_i32_0 = arith.constant 0 : i32
    %c0_i32_1 = arith.constant 0 : i32
    return %c0_i32, %c0_i32_0 : i32, i32
  }
  func.func @transform_4(%arg0: i32) -> (i32, i32) {
    %c0_i32 = arith.constant 0 : i32
    %c0_i32_0 = arith.constant 0 : i32
    %c0_i32_1 = arith.constant 0 : i32
    return %c0_i32, %c0_i32_0 : i32, i32
  }
  func.func @transform_5(%arg0: i32) -> (i32, i32) {
    %c0_i32 = arith.constant 0 : i32
    %c0_i32_0 = arith.constant 0 : i32
    %c0_i32_1 = arith.constant 0 : i32
    return %c0_i32, %c0_i32_0 : i32, i32
  }
  func.func @transform_6(%arg0: i32) -> (i32, i32) {
    %c0_i32 = arith.constant 0 : i32
    %c0_i32_0 = arith.constant 0 : i32
    return %arg0, %c0_i32 : i32, i32
  }
}

</mosaic_0001>

<llo_original>
// kernel: tpu_custom_call.1
$region0: #{tpu_custom_call.1}
  #allocation0 [shape = 'u32[]', space=smem, size = 0x4, offset = 0x4, fixed_abs, tag = 'smem constant byte address 0x4 - core index']
  #allocation1 [shape = 'u32[144,128]{1,0:T(1,128)}', space=vmem, size = 0x12000, scoped, tag = 'internal scratch']
  %s0 = inlined_call_operand.vmem [shape: s32[2,16], index: 0, kind: input, shape index: {}]
  %s1 = inlined_call_operand.vmem [shape: bf16[50,32], index: 1, kind: input, shape index: {}]
  %s2 = inlined_call_operand.vmem [shape: bf16[32,144], index: 2, kind: input, shape index: {}]
  %s3 = inlined_call_operand.hbm [shape: f32[3,16], index: 3, kind: input, shape index: {}]
  %s4 = inlined_call_operand.vmem [shape: bf16[48,128], index: 4, kind: input, shape index: {}]
  %s5 = inlined_call_operand.vmem [shape: f32[1,128], index: 5, kind: input, shape index: {}]
  %s6 = inlined_call_operand.hbm [shape: f32[2,128], index: 6, kind: output, shape index: {}]
  %s7 = sld [smem:[#allocation0]]
  $region38: #{tpu_custom_call.1} parent=0
    _
  %s9 = ssub.s32 1, %s7
  %s10 = scalar_select 0, %s9, %s7
  $region1: #{tpu_custom_call.1} parent=0
    #allocation2 [shape = 'u8[2048]{0}', space=vmem, size = 0x800, scoped, tag = 'input window, operand 3, single buffered']
    #allocation3 [shape = 's32[1]{0}', space=sflag, size = 0x4, scoped, tag = 'scoped memory for tpu_custom_call.1']
    #allocation4 [shape = 's32[1]{0}', space=sflag, size = 0x4, scoped, tag = 'scoped memory for tpu_custom_call.1']
    #allocation5 [shape = 'u8[1024]{0}', space=vmem, size = 0x400, scoped, tag = 'output window, operand 0, single buffered']
    %11 = vsyncpa [#allocation3], 0
    %12 = vsyncpa [#allocation4], 0
    // Predicated region
    $region2: #{tpu_custom_call.1} parent=1 // pred_check
      _
    $region3: #{tpu_custom_call.1} parent=1 // pred_check_branch
      %14 = sbr.rel (0) target = $region5
    $region4: #{tpu_custom_call.1} parent=1 // pred_region
      _
    $region5: #{tpu_custom_call.1} parent=1 // pred_fallthru
      _
    // Predicated region
    $region6: #{tpu_custom_call.1} parent=1 // pred_check
      _
    $region7: #{tpu_custom_call.1} parent=1 // pred_check_branch
      %16 = sbr.rel (0) target = $region9
    $region8: #{tpu_custom_call.1} parent=1 // pred_region
      _
    $region9: #{tpu_custom_call.1} parent=1 // pred_fallthru
      _
    // Predicated region
    $region10: #{tpu_custom_call.1} parent=1 // pred_check
      _
    $region11: #{tpu_custom_call.1} parent=1 // pred_check_branch
      %18 = sbr.rel (0) target = $region13
    $region12: #{tpu_custom_call.1} parent=1 // pred_region
      _
    $region13: #{tpu_custom_call.1} parent=1 // pred_fallthru
      _
    // Predicated region
    $region14: #{tpu_custom_call.1} parent=1 // pred_check
      _
    $region15: #{tpu_custom_call.1} parent=1 // pred_check_branch
      %20 = sbr.rel (0) target = $region17
    $region16: #{tpu_custom_call.1} parent=1 // pred_region
      %s22 = ssub.s32 64, 64
      %23 = vsyncadd [#allocation3], %s22
      %s25 = sshll.u32 [#allocation2], 4
      %s26 = int_to_ptr.vmem [resolvable:$true] %s25
      %28 = dma.hbm_to_vmem [thread:$0]  %s3, 64, %s26, [#allocation3]
    $region17: #{tpu_custom_call.1} parent=1 // pred_fallthru
      _
    // Predicated region
    $region18: #{tpu_custom_call.1} parent=1 // pred_check
      _
    $region19: #{tpu_custom_call.1} parent=1 // pred_check_branch
      %30 = sbr.rel (0) target = $region21
    $region20: #{tpu_custom_call.1} parent=1 // pred_region
      _
    $region21: #{tpu_custom_call.1} parent=1 // pred_fallthru
      _
    // Predicated region
    $region22: #{tpu_custom_call.1} parent=1 // pred_check
      _
    $region23: #{tpu_custom_call.1} parent=1 // pred_check_branch
      %32 = sbr.rel (0) target = $region25
    $region24: #{tpu_custom_call.1} parent=1 // pred_region
      _
    $region25: #{tpu_custom_call.1} parent=1 // pred_fallthru
      _
    // Predicated region
    $region26: #{tpu_custom_call.1} parent=1 // pred_check
      _
    $region27: #{tpu_custom_call.1} parent=1 // pred_check_branch
      %34 = sbr.rel (0) target = $region29
    $region28: #{tpu_custom_call.1} parent=1 // pred_region
      %35 = dma.done [#allocation3], 64
    $region29: #{tpu_custom_call.1} parent=1 // pred_fallthru
      _
    %v37 = vld [vmem:[%s0] sm:$0x3]
    %v38 = vlaneseq
    %v39 = vand.u32 %v38, 127
    %v40 = vlaneseq
    %v41 = vshrl.u32 %v40, 7
    %v42 = vsub.s32 0, %v41
    %v43 = vrot.slane %v37, %v42
    %45 = vbcast.lane.b32.xlu0 %v43, 256
    %v46 = vpop.permute.xlu0 %45
    %s48 = sor.u32 256, 8
    %49 = vbcast.lane.b32.xlu0 %v43, %s48
    %v50 = vpop.permute.xlu0 %49
    %v51 = vlaneseq
    %v52 = vshrl.u32 %v51, 7
    %v53 = vsub.s32 1, %v52
    %v54 = vrot.slane %v37, %v53
    %56 = vbcast.lane.b32.xlu0 %v54, 256
    %v57 = vpop.permute.xlu0 %56
    %s59 = sor.u32 256, 8
    %60 = vbcast.lane.b32.xlu0 %v54, %s59
    %v61 = vpop.permute.xlu0 %60
    %vm62 = vcmp.eq.s32.totalorder %v39, %v46
    %vm63 = vcmp.eq.s32.totalorder %v39, %v50
    %vm64 = vcmp.eq.s32.totalorder %v39, %v57
    %vm65 = vcmp.eq.s32.totalorder %v39, %v61
    %v66 = vsel %vm62, 1, 0
    %v67 = vsel %vm63, 1, 0
    %v68 = vsel %vm64, 1, 0
    %v69 = vsel %vm65, 1, 0
    %v70 = vcvt.s32.f32 %v66
    %v71 = vcvt.s32.f32 %v67
    %v72 = vcvt.s32.f32 %v68
    %v73 = vcvt.s32.f32 %v69
    %v74 = vpack.c.bf16 %v71, %v70
    %v75 = vpack.c.bf16 %v73, %v72
    %v76 = vld [vmem:[%s1] sm:$0xf]
    %v77 = vld [vmem:[%s1 + $0x4] sm:$0xf]
    %v78 = vld [vmem:[%s1 + $0x8] sm:$0xf]
    %v79 = vld [vmem:[%s1 + $0xc] sm:$0xf]
    %v80 = vld [vmem:[%s1 + $0x10] sm:$0xf]
    %v81 = vld [vmem:[%s1 + $0x14] sm:$0xf]
    %v82 = vld [vmem:[%s1 + $0x18] sm:$0x1]
    %v90 = vunpack.c.l.b16 %v76
    %v91 = vunpack.c.l.b16 %v77
    %v92 = vunpack.c.l.b16 %v78
    %v93 = vunpack.c.l.b16 %v79
    %v94 = vunpack.c.l.b16 %v80
    %v95 = vunpack.c.l.b16 %v81
    %v96 = vunpack.c.l.b16 %v82
    %v97 = vpack.c.b16 %v91, %v90
    %v98 = vpack.c.b16 %v93, %v92
    %v99 = vpack.c.b16 %v95, %v94
    %v100 = vpack.c.b16 %v96, %v96
    %vm104 = vcmask 408576
    %v106 = vsel %vm104, %v74, 0
    %v109 = vsel %vm104, %v75, 0
    %vm111 = vcmask 1040384
    %v113 = vsel %vm111, %v100, 0
    %115 = vmatprep.subr.bf16.mxu0 0
    %116 = vmatpush1.bf16.msra.mxu0 %v97
    %117 = vmatprep.subr.bf16.mxu0 0
    %118 = vmatpush1.bf16.msra.mxu0 %v98
    %119 = vmatprep.subr.bf16.mxu0 0
    %120 = vmatpush1.bf16.msra.mxu0 %v99
    %121 = vmatprep.subr.bf16.mxu0 0
    %122 = vmatpush1.bf16.msra.mxu0 %v113
    %123 = vmatprep.subr.bf16.mxu0 0
    %124 = vmatpush1.bf16.msra.mxu0 0
    %125 = vmatprep.subr.bf16.mxu0 0
    %126 = vmatpush1.bf16.msra.mxu0 0
    %127 = vmatprep.subr.bf16.mxu0 0
    %128 = vmatpush1.bf16.msra.mxu0 0
    %129 = vmatprep.subr.bf16.mxu0 0
    %130 = vmatpush1.bf16.msra.mxu0 0
    %131 = vmatprep.subr.bf16.mxu0 0
    %132 = vmatpush1.bf16.msra.mxu0 0
    %133 = vmatprep.subr.bf16.mxu0 0
    %134 = vmatpush1.bf16.msra.mxu0 0
    %135 = vmatprep.subr.bf16.mxu0 0
    %136 = vmatpush1.bf16.msra.mxu0 0
    %137 = vmatprep.subr.bf16.mxu0 0
    %138 = vmatpush1.bf16.msra.mxu0 0
    %139 = vmatprep.subr.bf16.mxu0 0
    %140 = vmatpush1.bf16.msra.mxu0 0
    %141 = vmatprep.subr.bf16.mxu0 0
    %142 = vmatpush1.bf16.msra.mxu0 0
    %143 = vmatprep.subr.bf16.mxu0 0
    %144 = vmatpush1.bf16.msra.mxu0 0
    %145 = vmatprep.subr.bf16.mxu0 0
    %146 = vmatpush1.bf16.msra.mxu0 0
    %147 = vmatprep.mubr.bf16.mxu0 0
    %148 = vmatmul.mubr.bf16.gmra.mrb[0].mxu0 %v106
    %v149 = vpop.f32.mrb[0].mxu0
    %v150 = vadd.f32 0.0, %v149
    %v151 = vpop.f32.mrb[0].mxu0
    %v152 = vpop.f32.mrb[0].mxu0
    %v153 = vadd.f32 0.0, %v152
    %v154 = vpop.f32.mrb[0].mxu0
    %155 = vmatprep.mubr.bf16.mxu0 0
    %156 = vmatmul.mubr.bf16.gmra.mrb[0].mxu0 %v109
    %v157 = vpop.f32.mrb[0].mxu0
    %v158 = vadd.f32 0.0, %v157
    %v159 = vpop.f32.mrb[0].mxu0
    %v160 = vpop.f32.mrb[0].mxu0
    %v161 = vadd.f32 0.0, %v160
    %v162 = vpop.f32.mrb[0].mxu0
    %163 = vdwg.mxu0
    %v164 = vpack.c.bf16 %v153, %v150
    %v165 = vpack.c.bf16 %v161, %v158
    %v166 = vld [vmem:[%s2] sm:$0xff]
    %v167 = vld [vmem:[%s2 + $0x8] sm:$0xff]
    %v168 = vld [vmem:[%s2 + $0x10] sm:$0xff]
    %v169 = vld [vmem:[%s2 + $0x18] sm:$0xff]
    %v174 = vunpack.c.l.b16 %v166
    %v175 = vunpack.c.h.b16 %v166
    %v176 = vunpack.c.l.b16 %v167
    %v177 = vunpack.c.h.b16 %v167
    %v178 = vunpack.c.l.b16 %v168
    %v179 = vunpack.c.h.b16 %v168
    %v180 = vunpack.c.l.b16 %v169
    %v181 = vunpack.c.h.b16 %v169
    %v182 = vpack.c.b16 %v176, %v174
    %v183 = vpack.c.b16 %v177, %v175
    %v184 = vpack.c.b16 %v180, %v178
    %v185 = vpack.c.b16 %v181, %v179
    %vm190 = vcmask 261120
    %v192 = vsel %vm190, %v164, 0
    %v195 = vsel %vm190, %v165, 0
    %197 = vmatprep.subr.bf16.mxu0 %v183
    %198 = vmatpush1.bf16.msra.mxu0 %v182
    %199 = vmatprep.subr.bf16.mxu0 %v185
    %200 = vmatpush1.bf16.msra.mxu0 %v184
    %201 = vmatprep.subr.bf16.mxu0 0
    %202 = vmatpush1.bf16.msra.mxu0 0
    %203 = vmatprep.subr.bf16.mxu0 0
    %204 = vmatpush1.bf16.msra.mxu0 0
    %205 = vmatprep.subr.bf16.mxu0 0
    %206 = vmatpush1.bf16.msra.mxu0 0
    %207 = vmatprep.subr.bf16.mxu0 0
    %208 = vmatpush1.bf16.msra.mxu0 0
    %209 = vmatprep.subr.bf16.mxu0 0
    %210 = vmatpush1.bf16.msra.mxu0 0
    %211 = vmatprep.subr.bf16.mxu0 0
    %212 = vmatpush1.bf16.msra.mxu0 0
    %213 = vmatprep.subr.bf16.mxu0 0
    %214 = vmatpush1.bf16.msra.mxu0 0
    %215 = vmatprep.subr.bf16.mxu0 0
    %216 = vmatpush1.bf16.msra.mxu0 0
    %217 = vmatprep.subr.bf16.mxu0 0
    %218 = vmatpush1.bf16.msra.mxu0 0
    %219 = vmatprep.subr.bf16.mxu0 0
    %220 = vmatpush1.bf16.msra.mxu0 0
    %221 = vmatprep.subr.bf16.mxu0 0
    %222 = vmatpush1.bf16.msra.mxu0 0
    %223 = vmatprep.subr.bf16.mxu0 0
    %224 = vmatpush1.bf16.msra.mxu0 0
    %225 = vmatprep.subr.bf16.mxu0 0
    %226 = vmatpush1.bf16.msra.mxu0 0
    %227 = vmatprep.subr.bf16.mxu0 0
    %228 = vmatpush1.bf16.msra.mxu0 0
    %229 = vmatprep.mubr.bf16.mxu0 0
    %230 = vmatmul.mubr.bf16.gmra.mrb[0].mxu0 %v192
    %v231 = vpop.f32.mrb[0].mxu0
    %v232 = vadd.f32 0.0, %v231
    %v233 = vpop.f32.mrb[0].mxu0
    %v234 = vadd.f32 0.0, %v233
    %v235 = vpop.f32.mrb[0].mxu0
    %v236 = vadd.f32 0.0, %v235
    %v237 = vpop.f32.mrb[0].mxu0
    %v238 = vadd.f32 0.0, %v237
    %239 = vmatprep.mubr.bf16.mxu0 0
    %240 = vmatmul.mubr.bf16.gmra.mrb[0].mxu0 %v195
    %v241 = vpop.f32.mrb[0].mxu0
    %v242 = vadd.f32 0.0, %v241
    %v243 = vpop.f32.mrb[0].mxu0
    %v244 = vadd.f32 0.0, %v243
    %v245 = vpop.f32.mrb[0].mxu0
    %v246 = vadd.f32 0.0, %v245
    %v247 = vpop.f32.mrb[0].mxu0
    %v248 = vadd.f32 0.0, %v247
    %249 = vdwg.mxu0
    %v250 = vadd.f32 %v232, 0.0
    %v251 = vadd.f32 %v236, 0.0
    %v252 = vadd.f32 %v242, 0.0
    %v253 = vadd.f32 %v246, 0.0
    %vm258 = vcmask 1046528
    %v259 = vrot.slane %v232, 1
    %v260 = vrot.slane %v236, 1
    %v261 = vsel %vm258, %v259, %v260
    %v262 = vrot.slane %v242, 1
    %v263 = vrot.slane %v246, 1
    %v264 = vsel %vm258, %v262, %v263
    %265 = vrot.lane.b32.xlu0 %v261, 112
    %v266 = vpop.permute.xlu0 %265
    %267 = vrot.lane.b32.xlu0 %v260, 112
    %v268 = vpop.permute.xlu0 %267
    %269 = vrot.lane.b32.xlu0 %v264, 112
    %v270 = vpop.permute.xlu0 %269
    %271 = vrot.lane.b32.xlu0 %v263, 112
    %v272 = vpop.permute.xlu0 %271
    %v277 = vadd.f32 %v250, %v266
    %v278 = vadd.f32 %v251, %v268
    %v279 = vadd.f32 %v252, %v270
    %v280 = vadd.f32 %v253, %v272
    %v281 = vld [vmem:[#allocation2] sm:$0x1]
    %v282 = vlaneseq
    %v283 = vshrl.u32 %v282, 7
    %v284 = vsub.s32 0, %v283
    %v285 = vrot.slane %v281, %v284
    %v286 = vadd.f32 %v277, %v285
    %v287 = vadd.f32 %v278, %v285
    %v288 = vadd.f32 %v279, %v285
    %v289 = vadd.f32 %v280, %v285
    %v290 = vmax.f32 %v286, 0.0
    %v291 = vmax.f32 %v287, 0.0
    %v292 = vmax.f32 %v288, 0.0
    %v293 = vmax.f32 %v289, 0.0
    %vm294 = vcmask 130048
    %v295 = vsel %vm294, %v290, -inf
    %vm296 = vcmask 129024
    %v297 = vsel %vm296, %v291, -inf
    %v298 = vmax.f32 %v295, %v297
    %v299 = vrot.slane %v298, 4
    %v300 = vmax.f32 %v298, %v299
    %v301 = vrot.slane %v300, 2
    %v302 = vmax.f32 %v300, %v301
    %v303 = vrot.slane %v302, 1
    %v304 = vmax.f32 %v302, %v303
    %v305 = vsel %vm294, %v292, -inf
    %v306 = vsel %vm296, %v293, -inf
    %v307 = vmax.f32 %v305, %v306
    %v308 = vrot.slane %v307, 4
    %v309 = vmax.f32 %v307, %v308
    %v310 = vrot.slane %v309, 2
    %v311 = vmax.f32 %v309, %v310
    %v312 = vrot.slane %v311, 1
    %v313 = vmax.f32 %v311, %v312
    %vm314 = vcmask 1045504
    %v315 = vrot.slane %v232, 2
    %v316 = vrot.slane %v236, 2
    %v317 = vsel %vm314, %v315, %v316
    %v318 = vrot.slane %v242, 2
    %v319 = vrot.slane %v246, 2
    %v320 = vsel %vm314, %v318, %v319
    %321 = vrot.lane.b32.xlu0 %v317, 96
    %v322 = vpop.permute.xlu0 %321
    %323 = vrot.lane.b32.xlu0 %v316, 96
    %v324 = vpop.permute.xlu0 %323
    %325 = vrot.lane.b32.xlu0 %v320, 96
    %v326 = vpop.permute.xlu0 %325
    %327 = vrot.lane.b32.xlu0 %v319, 96
    %v328 = vpop.permute.xlu0 %327
    %v333 = vadd.f32 %v277, %v322
    %v334 = vadd.f32 %v278, %v324
    %v335 = vadd.f32 %v279, %v326
    %v336 = vadd.f32 %v280, %v328
    %v337 = vld [vmem:[#allocation2 + $0x1] sm:$0x1]
    %v338 = vlaneseq
    %v339 = vshrl.u32 %v338, 7
    %v340 = vsub.s32 0, %v339
    %v341 = vrot.slane %v337, %v340
    %343 = vrot.lane.b32.xlu0 %v341, 32
    %v344 = vpop.permute.xlu0 %343
    %v346 = vadd.f32 %v333, %v344
    %v347 = vadd.f32 %v334, %v344
    %v348 = vadd.f32 %v335, %v344
    %v349 = vadd.f32 %v336, %v344
    %v350 = vmax.f32 %v346, 0.0
    %v351 = vmax.f32 %v347, 0.0
    %v352 = vmax.f32 %v348, 0.0
    %v353 = vmax.f32 %v349, 0.0
    %vm354 = vcmask 392448
    %v355 = vsel %vm354, %v350, -inf
    %vm356 = vcmask 390400
    %v357 = vsel %vm356, %v351, -inf
    %v358 = vmax.f32 %v355, %v357
    %v359 = vrot.slane %v358, 4
    %v360 = vmax.f32 %v358, %v359
    %v361 = vrot.slane %v360, 2
    %v362 = vmax.f32 %v360, %v361
    %v363 = vrot.slane %v362, 1
    %v364 = vmax.f32 %v362, %v363
    %v365 = vsel %vm354, %v352, -inf
    %v366 = vsel %vm356, %v353, -inf
    %v367 = vmax.f32 %v365, %v366
    %v368 = vrot.slane %v367, 4
    %v369 = vmax.f32 %v367, %v368
    %v370 = vrot.slane %v369, 2
    %v371 = vmax.f32 %v369, %v370
    %v372 = vrot.slane %v371, 1
    %v373 = vmax.f32 %v371, %v372
    %vm378 = vcmask 1044480
    %v379 = vrot.slane %v234, 3
    %v380 = vrot.slane %v238, 3
    %v381 = vsel %vm378, %v379, %v380
    %v382 = vrot.slane %v244, 3
    %v383 = vrot.slane %v248, 3
    %v384 = vsel %vm378, %v382, %v383
    %385 = vrot.lane.b32.xlu0 %v381, 80
    %v386 = vpop.permute.xlu0 %385
    %387 = vrot.lane.b32.xlu0 %v380, 80
    %v388 = vpop.permute.xlu0 %387
    %389 = vrot.lane.b32.xlu0 %v384, 80
    %v390 = vpop.permute.xlu0 %389
    %391 = vrot.lane.b32.xlu0 %v383, 80
    %v392 = vpop.permute.xlu0 %391
    %v397 = vadd.f32 %v333, %v386
    %v398 = vadd.f32 %v334, %v388
    %v399 = vadd.f32 %v335, %v390
    %v400 = vadd.f32 %v336, %v392
    %v401 = vld [vmem:[#allocation2 + $0x2] sm:$0x1]
    %v402 = vlaneseq
    %v403 = vshrl.u32 %v402, 7
    %v404 = vsub.s32 0, %v403
    %v405 = vrot.slane %v401, %v404
    %407 = vrot.lane.b32.xlu0 %v405, 80
    %v408 = vpop.permute.xlu0 %407
    %v410 = vadd.f32 %v397, %v408
    %v411 = vadd.f32 %v398, %v408
    %v412 = vadd.f32 %v399, %v408
    %v413 = vadd.f32 %v400, %v408
    %v414 = vmax.f32 %v410, 0.0
    %v415 = vmax.f32 %v411, 0.0
    %v416 = vmax.f32 %v412, 0.0
    %v417 = vmax.f32 %v413, 0.0
    %vm418 = vcmask 786048
    %v419 = vsel %vm418, %v414, -inf
    %vm420 = vcmask 782976
    %v421 = vsel %vm420, %v415, -inf
    %v422 = vmax.f32 %v419, %v421
    %v423 = vrot.slane %v422, 4
    %v424 = vmax.f32 %v422, %v423
    %v425 = vrot.slane %v424, 2
    %v426 = vmax.f32 %v424, %v425
    %v427 = vrot.slane %v426, 1
    %v428 = vmax.f32 %v426, %v427
    %v429 = vsel %vm418, %v416, -inf
    %v430 = vsel %vm420, %v417, -inf
    %v431 = vmax.f32 %v429, %v430
    %v432 = vrot.slane %v431, 4
    %v433 = vmax.f32 %v431, %v432
    %v434 = vrot.slane %v433, 2
    %v435 = vmax.f32 %v433, %v434
    %v436 = vrot.slane %v435, 1
    %v437 = vmax.f32 %v435, %v436
    %vm440 = vcmask 1041409
    %v441 = vsel %vm440, %v313, %v304
    %v445 = vsel %vm440, %v373, %v364
    %446 = vrot.lane.b32.xlu0 %v445, 112
    %v447 = vpop.permute.xlu0 %446
    %v451 = vsel %vm440, %v437, %v428
    %452 = vrot.lane.b32.xlu0 %v451, 80
    %v453 = vpop.permute.xlu0 %452
    %v455 = vsel %vm294, %v441, %v447
    %v456 = vsel %vm190, %v455, %v453
    %v457 = vpack.c.bf16 %v456, %v456
    %v458 = vld [vmem:[%s4] sm:$0xf]
    %v459 = vld [vmem:[%s4 + $0x4] sm:$0xf]
    %v460 = vld [vmem:[%s4 + $0x8] sm:$0xf]
    %v461 = vld [vmem:[%s4 + $0xc] sm:$0xf]
    %v462 = vld [vmem:[%s4 + $0x10] sm:$0xf]
    %v463 = vld [vmem:[%s4 + $0x14] sm:$0xf]
    %v464 = vld [vmem:[%s5] sm:$0x1]
    %v466 = vlaneseq
    %v467 = vshrl.u32 %v466, 7
    %v468 = vsub.s32 0, %v467
    %v469 = vrot.slane %v464, %v468
    %v477 = vunpack.c.l.b16 %v458
    %v478 = vunpack.c.l.b16 %v459
    %v479 = vunpack.c.l.b16 %v460
    %v480 = vunpack.c.l.b16 %v461
    %v481 = vunpack.c.l.b16 %v462
    %v482 = vunpack.c.l.b16 %v463
    %v483 = vpack.c.b16 %v478, %v477
    %v484 = vpack.c.b16 %v480, %v479
    %v485 = vpack.c.b16 %v482, %v481
    %vm489 = vcmask 392192
    %v491 = vsel %vm489, %v457, 0
    %493 = vmatprep.subr.bf16.mxu0 0
    %494 = vmatpush1.bf16.msra.mxu0 %v483
    %495 = vmatprep.subr.bf16.mxu0 0
    %496 = vmatpush1.bf16.msra.mxu0 %v484
    %497 = vmatprep.subr.bf16.mxu0 0
    %498 = vmatpush1.bf16.msra.mxu0 %v485
    %499 = vmatprep.subr.bf16.mxu0 0
    %500 = vmatpush1.bf16.msra.mxu0 0
    %501 = vmatprep.subr.bf16.mxu0 0
    %502 = vmatpush1.bf16.msra.mxu0 0
    %503 = vmatprep.subr.bf16.mxu0 0
    %504 = vmatpush1.bf16.msra.mxu0 0
    %505 = vmatprep.subr.bf16.mxu0 0
    %506 = vmatpush1.bf16.msra.mxu0 0
    %507 = vmatprep.subr.bf16.mxu0 0
    %508 = vmatpush1.bf16.msra.mxu0 0
    %509 = vmatprep.subr.bf16.mxu0 0
    %510 = vmatpush1.bf16.msra.mxu0 0
    %511 = vmatprep.subr.bf16.mxu0 0
    %512 = vmatpush1.bf16.msra.mxu0 0
    %513 = vmatprep.subr.bf16.mxu0 0
    %514 = vmatpush1.bf16.msra.mxu0 0
    %515 = vmatprep.subr.bf16.mxu0 0
    %516 = vmatpush1.bf16.msra.mxu0 0
    %517 = vmatprep.subr.bf16.mxu0 0
    %518 = vmatpush1.bf16.msra.mxu0 0
    %519 = vmatprep.subr.bf16.mxu0 0
    %520 = vmatpush1.bf16.msra.mxu0 0
    %521 = vmatprep.subr.bf16.mxu0 0
    %522 = vmatpush1.bf16.msra.mxu0 0
    %523 = vmatprep.subr.bf16.mxu0 0
    %524 = vmatpush1.bf16.msra.mxu0 0
    %525 = vmatprep.mubr.bf16.mxu0 0
    %526 = vmatmul.mubr.bf16.gmra.mrb[0].mxu0 %v491
    %v527 = vpop.f32.mrb[0].mxu0
    %v528 = vadd.f32 %v469, %v527
    %v529 = vpop.f32.mrb[0].mxu0
    %v530 = vpop.f32.mrb[0].mxu0
    %v531 = vpop.f32.mrb[0].mxu0
    %532 = vdwg.mxu0
    %533 = vst [vmem:[#allocation5] sm:$0x3] %v528
    // Predicated region
    $region30: #{tpu_custom_call.1} parent=1 // pred_check
      _
    $region31: #{tpu_custom_call.1} parent=1 // pred_check_branch
      %535 = sbr.rel (0) target = $region33
    $region32: #{tpu_custom_call.1} parent=1 // pred_region
      %s537 = ssub.s32 32, 32
      %538 = vsyncadd [#allocation4], %s537
      %s540 = sshll.u32 [#allocation5], 4
      %s541 = int_to_ptr.vmem [resolvable:$true] %s540
      %543 = dma.vmem_to_hbm [thread:$0]  %s541, 32, %s6, [#allocation4]
    $region33: #{tpu_custom_call.1} parent=1 // pred_fallthru
      _
    // Predicated region
    $region34: #{tpu_custom_call.1} parent=1 // pred_check
      _
    $region35: #{tpu_custom_call.1} parent=1 // pred_check_branch
      %545 = sbr.rel (0) target = $region37
    $region36: #{tpu_custom_call.1} parent=1 // pred_region
      %546 = dma.done [#allocation4], 32
    $region37: #{tpu_custom_call.1} parent=1 // pred_fallthru
      _
    %547 = vsyncpa [#allocation3], 1
    %548 = vsyncpa [#allocation4], 1

</llo_original>
